<compile_context>
chip_gen: v6e
topology: v6e:2x2x1
jax: 0.10.0
libtpu: 0.0.40
codegen_flags: <defaults>
</compile_context>

<pallas_src>
import functools

import jax
import jax.numpy as jnp
import numpy as np
from jax.experimental import pallas as pl
from jax.experimental.pallas import tpu as pltpu


_LANE = 128      # TPU lane width
_SUBLANE = 16    # batch-tile granularity (covers both f32 (8) and bf16 (16))


def _round_up(x, m):
    return (x + m - 1) // m * m


# ----------------------------------------------------------------------------
# Kernel factory: n_layers is static, layer loop is unrolled in the trace.
# ----------------------------------------------------------------------------
def _make_prenet_kernel(n_layers):
    def kernel(x_ref, *rest):
        # rest = (w_0..w_{L-1}, mask_0..mask_{L-1}, out)
        w_refs = rest[:n_layers]
        m_refs = rest[n_layers:2 * n_layers]
        out_ref = rest[2 * n_layers]

        h = x_ref[...]                                       # (Bb, D0) f32
        for li in range(n_layers):
            w = w_refs[li][...]                              # (D_li, D_{li+1}) bf16
            # Linear (no bias): bf16 operands on the MXU, f32 accumulation.
            a = jnp.dot(h.astype(w.dtype), w,
                        preferred_element_type=jnp.float32)
            # Fused ReLU + dropout: mask already holds 0 or 1/(1-p).
            h = jnp.maximum(a, 0.0) * m_refs[li][...]
        out_ref[...] = h.astype(out_ref.dtype)

    return kernel


# ----------------------------------------------------------------------------
# Wrapper: parameter re-layout / padding, dropout-mask draw, pallas_call.
# ----------------------------------------------------------------------------
@functools.partial(jax.jit, static_argnames=("p_drop", "block_b", "mxu_dtype"))
def prenet_forward(weights, x, key, *, p_drop=0.5, block_b=256,
                   mxu_dtype=jnp.bfloat16):
    """Prenet forward.

    weights: tuple of PyTorch-layout (out_dim, in_dim) matrices (bias-free).
    x:       (B, in_dim) float input.
    key:     jax.random key for the dropout draws.
    Returns (out, masks): out is (B, sizes[-1]); masks are the per-layer
    scaled keep-masks (values in {0, 1/(1-p)}) used by the kernel.
    """
    n_layers = len(weights)
    B, d_in = x.shape

    dims = [d_in] + [int(w.shape[0]) for w in weights]
    pdims = [_round_up(d, _LANE) for d in dims]              # lane-dense dims

    # Batch tile: as large as possible (<= block_b), whole batch for tiny B.
    bb = _round_up(min(block_b, _round_up(B, _SUBLANE)), _SUBLANE)
    bp = _round_up(B, bb)                                    # padded batch

    scale = 1.0 / (1.0 - p_drop)

    # --- plain-JAX glue: transpose to (in, out), zero-pad to 128 multiples,
    #     cast to the MXU dtype.
    ws = []
    for li, w in enumerate(weights):
        wt = jnp.asarray(w, jnp.float32).T                   # (in, out)
        wt = jnp.pad(wt, ((0, pdims[li] - dims[li]),
                          (0, pdims[li + 1] - dims[li + 1])))
        ws.append(wt.astype(mxu_dtype))

    xp = jnp.pad(jnp.asarray(x, jnp.float32),
                 ((0, bp - B), (0, pdims[0] - dims[0])))

    # Dropout keep-masks with the 1/(1-p) scale folded in (0 or scale).
    # TODO(synk): the torch RNG stream cannot be reproduced bit-for-bit; the
    # Bernoulli(keep=1-p) statistics and scaling match F.dropout(training=True).
    keys = jax.random.split(key, n_layers)
    masks = [
        jax.random.bernoulli(keys[li], 1.0 - p_drop,
                             (bp, pdims[li + 1])).astype(jnp.float32) * scale
        for li in range(n_layers)
    ]

    grid = (bp // bb,)
    kernel = _make_prenet_kernel(n_layers)

    in_specs = [pl.BlockSpec((bb, pdims[0]), lambda b: (b, 0))]
    in_specs += [pl.BlockSpec((pdims[li], pdims[li + 1]), lambda b: (0, 0))
                 for li in range(n_layers)]
    in_specs += [pl.BlockSpec((bb, pdims[li + 1]), lambda b: (b, 0))
                 for li in range(n_layers)]

    out = pl.pallas_call(
        kernel,
        out_shape=jax.ShapeDtypeStruct((bp, pdims[-1]), jnp.float32),
        grid=grid,
        in_specs=in_specs,
        out_specs=pl.BlockSpec((bb, pdims[-1]), lambda b: (b, 0)),
        compiler_params=pltpu.CompilerParams(
            dimension_semantics=("parallel",)),
    )(xp, *ws, *masks)

    out = out[:B, :dims[-1]]
    masks_out = [m[:B, :dims[li + 1]] for li, m in enumerate(masks)]
    return out, masks_out


# ----------------------------------------------------------------------------
# Demo / verification.
# ----------------------------------------------------------------------------
if __name__ == "__main__":
    # small shapes consistent with the module (Tacotron2 prenet-ish)
    B, in_dim = 16, 80
    sizes = [256, 256]
    p_drop = 0.5

    key = jax.random.PRNGKey(0)
    k_x, k_w, k_drop = jax.random.split(key, 3)
    in_sizes = [in_dim] + sizes[:-1]
    wkeys = jax.random.split(k_w, len(sizes))

    weights = []
    for (i_s, o_s), kk in zip(zip(in_sizes, sizes), wkeys):
        # LinearNorm: xavier-uniform init, bias=False
        limit = float(np.sqrt(6.0 / (i_s + o_s)))
        weights.append(
            jax.random.uniform(kk, (o_s, i_s), jnp.float32, -limit, limit))

    x = jax.random.normal(k_x, (B, in_dim), jnp.float32)

    out, masks = prenet_forward(tuple(weights), x, k_drop, p_drop=p_drop)
    jax.block_until_ready((out, masks))

    # Reference uses the same dropout masks and the same bf16-operand /
    # f32-accumulation matmul, so it verifies the linear/ReLU/dropout math.
    h = x
    for w, m in zip(weights, masks):
        w_bf = jnp.asarray(w, jnp.float32).T.astype(jnp.bfloat16)   # (in, out)
        a = jnp.dot(h.astype(jnp.bfloat16), w_bf,
                    preferred_element_type=jnp.float32)
        h = jnp.maximum(a, 0.0) * m                                  # m in {0, 2}
    np.testing.assert_allclose(np.asarray(out), np.asarray(h),
                               rtol=2e-3, atol=2e-3)

    # sanity-check the dropout statistics (keep rate should be ~1-p = 0.5)
    keep_rate = float(np.mean([np.mean(np.asarray(m) > 0) for m in masks]))
    assert 0.35 < keep_rate < 0.65, f"dropout keep rate {keep_rate} != ~0.5"

    print("KERNEL_OK")
</pallas_src>

<mosaic_0001>
module attributes {stable_mosaic.version = 11 : i64} {
  func.func @kernel(%arg0: i32, %arg1: memref<16x128xf32, #tpu.memory_space<vmem>>, %arg2: memref<128x256xbf16, #tpu.memory_space<vmem>>, %arg3: memref<256x256xbf16, #tpu.memory_space<vmem>>, %arg4: memref<16x256xf32, #tpu.memory_space<vmem>>, %arg5: memref<16x256xf32, #tpu.memory_space<vmem>>, %arg6: memref<16x256xf32, #tpu.memory_space<vmem>>) attributes {dimension_semantics = [#tpu.dimension_semantics<parallel>], iteration_bounds = array<i64: 1>, scalar_prefetch = 0 : i64, scratch_operands = 0 : i64, tpu.core_type = #tpu.core_type<tc>, window_params = [{transform_indices = @transform_0, window_bounds = array<i64: 16, 128>}, {pipeline_mode = #tpu.pipeline_mode<synchronous>, transform_indices = @transform_1, window_bounds = array<i64: 128, 256>}, {pipeline_mode = #tpu.pipeline_mode<synchronous>, transform_indices = @transform_2, window_bounds = array<i64: 256, 256>}, {transform_indices = @transform_3, window_bounds = array<i64: 16, 256>}, {transform_indices = @transform_4, window_bounds = array<i64: 16, 256>}, {transform_indices = @transform_5, window_bounds = array<i64: 16, 256>}]} {
    %c0 = arith.constant 0 : index
    %c0_0 = arith.constant 0 : index
    %0 = vector.load %arg1[%c0, %c0_0] : memref<16x128xf32, #tpu.memory_space<vmem>>, vector<16x128xf32>
    %c0_1 = arith.constant 0 : index
    %c0_2 = arith.constant 0 : index
    %1 = vector.load %arg2[%c0_1, %c0_2] : memref<128x256xbf16, #tpu.memory_space<vmem>>, vector<128x256xbf16>
    %2 = arith.truncf %0 : vector<16x128xf32> to vector<16x128xbf16>
    %cst = arith.constant dense<0.000000e+00> : vector<16x256xf32>
    %3 = tpu.matmul %2, %1, %cst {dimension_numbers = #tpu.dot_dimension_numbers<[1], [0], [0], [1], [0, 0, 1, 1], [], []>} : vector<16x128xbf16>, vector<128x256xbf16>, vector<16x256xf32> -> vector<16x256xf32>
    %cst_3 = arith.constant 0.000000e+00 : f32
    %4 = vector.broadcast %cst_3 : f32 to vector<16x256xf32>
    %5 = arith.maximumf %3, %4 : vector<16x256xf32>
    %c0_4 = arith.constant 0 : index
    %c0_5 = arith.constant 0 : index
    %6 = vector.load %arg4[%c0_4, %c0_5] : memref<16x256xf32, #tpu.memory_space<vmem>>, vector<16x256xf32>
    %7 = arith.mulf %5, %6 : vector<16x256xf32>
    %c0_6 = arith.constant 0 : index
    %c0_7 = arith.constant 0 : index
    %8 = vector.load %arg3[%c0_6, %c0_7] : memref<256x256xbf16, #tpu.memory_space<vmem>>, vector<256x256xbf16>
    %9 = arith.truncf %7 : vector<16x256xf32> to vector<16x256xbf16>
    %cst_8 = arith.constant dense<0.000000e+00> : vector<16x256xf32>
    %10 = tpu.matmul %9, %8, %cst_8 {dimension_numbers = #tpu.dot_dimension_numbers<[1], [0], [0], [1], [0, 0, 1, 1], [], []>} : vector<16x256xbf16>, vector<256x256xbf16>, vector<16x256xf32> -> vector<16x256xf32>
    %cst_9 = arith.constant 0.000000e+00 : f32
    %11 = vector.broadcast %cst_9 : f32 to vector<16x256xf32>
    %12 = arith.maximumf %10, %11 : vector<16x256xf32>
    %c0_10 = arith.constant 0 : index
    %c0_11 = arith.constant 0 : index
    %13 = vector.load %arg5[%c0_10, %c0_11] : memref<16x256xf32, #tpu.memory_space<vmem>>, vector<16x256xf32>
    %14 = arith.mulf %12, %13 : vector<16x256xf32>
    %c0_12 = arith.constant 0 : index
    %c0_13 = arith.constant 0 : index
    %15 = vector.load %arg6[%c0_12, %c0_13] : memref<16x256xf32, #tpu.memory_space<vmem>>, vector<16x256xf32>
    tpu.vector_store %arg6[%c0_12, %c0_13], %14 {strides = array<i32>} : memref<16x256xf32, #tpu.memory_space<vmem>>, vector<16x256xf32>,
    return
  }
  func.func @transform_0(%arg0: i32) -> (i32, i32) {
    %c0_i32 = arith.constant 0 : i32
    %c0_i32_0 = arith.constant 0 : i32
    return %arg0, %c0_i32 : i32, i32
  }
  func.func @transform_1(%arg0: i32) -> (i32, i32) {
    %c0_i32 = arith.constant 0 : i32
    %c0_i32_0 = arith.constant 0 : i32
    %c0_i32_1 = arith.constant 0 : i32
    return %c0_i32, %c0_i32_0 : i32, i32
  }
  func.func @transform_2(%arg0: i32) -> (i32, i32) {
    %c0_i32 = arith.constant 0 : i32
    %c0_i32_0 = arith.constant 0 : i32
    %c0_i32_1 = arith.constant 0 : i32
    return %c0_i32, %c0_i32_0 : i32, i32
  }
  func.func @transform_3(%arg0: i32) -> (i32, i32) {
    %c0_i32 = arith.constant 0 : i32
    %c0_i32_0 = arith.constant 0 : i32
    return %arg0, %c0_i32 : i32, i32
  }
  func.func @transform_4(%arg0: i32) -> (i32, i32) {
    %c0_i32 = arith.constant 0 : i32
    %c0_i32_0 = arith.constant 0 : i32
    return %arg0, %c0_i32 : i32, i32
  }
  func.func @transform_5(%arg0: i32) -> (i32, i32) {
    %c0_i32 = arith.constant 0 : i32
    %c0_i32_0 = arith.constant 0 : i32
    return %arg0, %c0_i32 : i32, i32
  }
}

</mosaic_0001>

<llo_original>
// kernel: prenet_forward.3
$region0: #{prenet_forward.3}
  #allocation0 [shape = 'u32[]', space=smem, size = 0x4, offset = 0x4, fixed_abs, tag = 'smem constant byte address 0x4 - core index']
  #allocation1 [shape = 'u32[144,128]{1,0:T(1,128)}', space=vmem, size = 0x12000, scoped, tag = 'internal scratch']
  %s0 = inlined_call_operand.vmem [shape: f32[16,128], index: 0, kind: input, shape index: {}]
  %s1 = inlined_call_operand.vmem [shape: bf16[128,256], index: 1, kind: input, shape index: {}]
  %s2 = inlined_call_operand.vmem [shape: bf16[256,256], index: 2, kind: input, shape index: {}]
  %s3 = inlined_call_operand.vmem [shape: f32[16,256], index: 3, kind: input, shape index: {}]
  %s4 = inlined_call_operand.vmem [shape: f32[16,256], index: 4, kind: input, shape index: {}]
  %s5 = inlined_call_operand.hbm [shape: f32[16,256], index: 5, kind: output, shape index: {}]
  %s6 = sld [smem:[#allocation0]]
  $region30: #{prenet_forward.3} parent=0
    _
  %s8 = ssub.s32 1, %s6
  %s9 = scalar_select 0, %s8, %s6
  $region1: #{prenet_forward.3} parent=0
    #allocation2 [shape = 'u8[16384]{0}', space=vmem, size = 0x4000, scoped, tag = 'output window, operand 0, single buffered']
    #allocation3 [shape = 's32[1]{0}', space=sflag, size = 0x4, scoped, tag = 'scoped memory for prenet_forward.3']
    %10 = vsyncpa [#allocation3], 0
    // Predicated region
    $region2: #{prenet_forward.3} parent=1 // pred_check
      _
    $region3: #{prenet_forward.3} parent=1 // pred_check_branch
      %12 = sbr.rel (0) target = $region5
    $region4: #{prenet_forward.3} parent=1 // pred_region
      _
    $region5: #{prenet_forward.3} parent=1 // pred_fallthru
      _
    // Predicated region
    $region6: #{prenet_forward.3} parent=1 // pred_check
      _
    $region7: #{prenet_forward.3} parent=1 // pred_check_branch
      %14 = sbr.rel (0) target = $region9
    $region8: #{prenet_forward.3} parent=1 // pred_region
      _
    $region9: #{prenet_forward.3} parent=1 // pred_fallthru
      _
    // Predicated region
    $region10: #{prenet_forward.3} parent=1 // pred_check
      _
    $region11: #{prenet_forward.3} parent=1 // pred_check_branch
      %16 = sbr.rel (0) target = $region13
    $region12: #{prenet_forward.3} parent=1 // pred_region
      _
    $region13: #{prenet_forward.3} parent=1 // pred_fallthru
      _
    // Predicated region
    $region14: #{prenet_forward.3} parent=1 // pred_check
      _
    $region15: #{prenet_forward.3} parent=1 // pred_check_branch
      %18 = sbr.rel (0) target = $region17
    $region16: #{prenet_forward.3} parent=1 // pred_region
      _
    $region17: #{prenet_forward.3} parent=1 // pred_fallthru
      _
    // Predicated region
    $region18: #{prenet_forward.3} parent=1 // pred_check
      _
    $region19: #{prenet_forward.3} parent=1 // pred_check_branch
      %20 = sbr.rel (0) target = $region21
    $region20: #{prenet_forward.3} parent=1 // pred_region
      _
    $region21: #{prenet_forward.3} parent=1 // pred_fallthru
      _
    %v22 = vld [vmem:[%s0] sm:$0xff]
    %v23 = vld [vmem:[%s0 + $0x8] sm:$0xff]
    %v24 = vld [vmem:[%s1] sm:$0xff]
    %v25 = vld [vmem:[%s1 + $0x8] sm:$0xff]
    %v26 = vld [vmem:[%s1 + $0x10] sm:$0xff]
    %v27 = vld [vmem:[%s1 + $0x18] sm:$0xff]
    %v28 = vld [vmem:[%s1 + $0x20] sm:$0xff]
    %v29 = vld [vmem:[%s1 + $0x28] sm:$0xff]
    %v30 = vld [vmem:[%s1 + $0x30] sm:$0xff]
    %v31 = vld [vmem:[%s1 + $0x38] sm:$0xff]
    %v32 = vld [vmem:[%s1 + $0x40] sm:$0xff]
    %v33 = vld [vmem:[%s1 + $0x48] sm:$0xff]
    %v34 = vld [vmem:[%s1 + $0x50] sm:$0xff]
    %v35 = vld [vmem:[%s1 + $0x58] sm:$0xff]
    %v36 = vld [vmem:[%s1 + $0x60] sm:$0xff]
    %v37 = vld [vmem:[%s1 + $0x68] sm:$0xff]
    %v38 = vld [vmem:[%s1 + $0x70] sm:$0xff]
    %v39 = vld [vmem:[%s1 + $0x78] sm:$0xff]
    %v40 = vpack.c.bf16 %v23, %v22
    %v57 = vunpack.c.l.b16 %v24
    %v58 = vunpack.c.h.b16 %v24
    %v59 = vunpack.c.l.b16 %v25
    %v60 = vunpack.c.h.b16 %v25
    %v61 = vunpack.c.l.b16 %v26
    %v62 = vunpack.c.h.b16 %v26
    %v63 = vunpack.c.l.b16 %v27
    %v64 = vunpack.c.h.b16 %v27
    %v65 = vunpack.c.l.b16 %v28
    %v66 = vunpack.c.h.b16 %v28
    %v67 = vunpack.c.l.b16 %v29
    %v68 = vunpack.c.h.b16 %v29
    %v69 = vunpack.c.l.b16 %v30
    %v70 = vunpack.c.h.b16 %v30
    %v71 = vunpack.c.l.b16 %v31
    %v72 = vunpack.c.h.b16 %v31
    %v73 = vunpack.c.l.b16 %v32
    %v74 = vunpack.c.h.b16 %v32
    %v75 = vunpack.c.l.b16 %v33
    %v76 = vunpack.c.h.b16 %v33
    %v77 = vunpack.c.l.b16 %v34
    %v78 = vunpack.c.h.b16 %v34
    %v79 = vunpack.c.l.b16 %v35
    %v80 = vunpack.c.h.b16 %v35
    %v81 = vunpack.c.l.b16 %v36
    %v82 = vunpack.c.h.b16 %v36
    %v83 = vunpack.c.l.b16 %v37
    %v84 = vunpack.c.h.b16 %v37
    %v85 = vunpack.c.l.b16 %v38
    %v86 = vunpack.c.h.b16 %v38
    %v87 = vunpack.c.l.b16 %v39
    %v88 = vunpack.c.h.b16 %v39
    %v89 = vpack.c.b16 %v59, %v57
    %v90 = vpack.c.b16 %v60, %v58
    %v91 = vpack.c.b16 %v63, %v61
    %v92 = vpack.c.b16 %v64, %v62
    %v93 = vpack.c.b16 %v67, %v65
    %v94 = vpack.c.b16 %v68, %v66
    %v95 = vpack.c.b16 %v71, %v69
    %v96 = vpack.c.b16 %v72, %v70
    %v97 = vpack.c.b16 %v75, %v73
    %v98 = vpack.c.b16 %v76, %v74
    %v99 = vpack.c.b16 %v79, %v77
    %v100 = vpack.c.b16 %v80, %v78
    %v101 = vpack.c.b16 %v83, %v81
    %v102 = vpack.c.b16 %v84, %v82
    %v103 = vpack.c.b16 %v87, %v85
    %v104 = vpack.c.b16 %v88, %v86
    %121 = vmatprep.subr.bf16.mxu0 %v104
    %122 = vmatpush1.bf16.msra.mxu0 %v103
    %123 = vmatprep.subr.bf16.mxu0 %v102
    %124 = vmatpush1.bf16.msra.mxu0 %v101
    %125 = vmatprep.subr.bf16.mxu0 %v100
    %126 = vmatpush1.bf16.msra.mxu0 %v99
    %127 = vmatprep.subr.bf16.mxu0 %v98
    %128 = vmatpush1.bf16.msra.mxu0 %v97
    %129 = vmatprep.subr.bf16.mxu0 %v96
    %130 = vmatpush1.bf16.msra.mxu0 %v95
    %131 = vmatprep.subr.bf16.mxu0 %v94
    %132 = vmatpush1.bf16.msra.mxu0 %v93
    %133 = vmatprep.subr.bf16.mxu0 %v92
    %134 = vmatpush1.bf16.msra.mxu0 %v91
    %135 = vmatprep.subr.bf16.mxu0 %v90
    %136 = vmatpush1.bf16.msra.mxu0 %v89
    %137 = vmatprep.subr.bf16.mxu0 0
    %138 = vmatpush2.bf16.msra.mxu0 0
    %139 = vmatprep.subr.bf16.mxu0 0
    %140 = vmatpush2.bf16.msra.mxu0 0
    %141 = vmatprep.subr.bf16.mxu0 0
    %142 = vmatpush2.bf16.msra.mxu0 0
    %143 = vmatprep.subr.bf16.mxu0 0
    %144 = vmatpush2.bf16.msra.mxu0 0
    %145 = vmatprep.subr.bf16.mxu0 0
    %146 = vmatpush2.bf16.msra.mxu0 0
    %147 = vmatprep.subr.bf16.mxu0 0
    %148 = vmatpush2.bf16.msra.mxu0 0
    %149 = vmatprep.subr.bf16.mxu0 0
    %150 = vmatpush2.bf16.msra.mxu0 0
    %151 = vmatprep.subr.bf16.mxu0 0
    %152 = vmatpush2.bf16.msra.mxu0 0
    %153 = vmatprep.mubr.bf16.mxu0 0
    %154 = vmatmul.mubr.bf16.gmra.mxu0 %v40
    %v155 = vpop.f32.mrf.mxu0
    %v156 = vadd.f32 0.0, %v155
    %v157 = vpop.f32.mrf.mxu0
    %v158 = vadd.f32 0.0, %v157
    %v159 = vpop.f32.mrf.mxu0
    %v160 = vadd.f32 0.0, %v159
    %v161 = vpop.f32.mrf.mxu0
    %v162 = vadd.f32 0.0, %v161
    %163 = vdwg.mxu0
    %v164 = vmax.f32 %v156, 0.0
    %v165 = vmax.f32 %v158, 0.0
    %v166 = vmax.f32 %v160, 0.0
    %v167 = vmax.f32 %v162, 0.0
    %v168 = vld [vmem:[%s3] sm:$0xff]
    %v169 = vld [vmem:[%s3 + $0x8] sm:$0xff]
    %v170 = vld [vmem:[%s3 + $0x10] sm:$0xff]
    %v171 = vld [vmem:[%s3 + $0x18] sm:$0xff]
    %v172 = vmul.f32 %v164, %v168
    %v173 = vmul.f32 %v165, %v169
    %v174 = vmul.f32 %v166, %v170
    %v175 = vmul.f32 %v167, %v171
    %v176 = vld [vmem:[%s2] sm:$0xff]
    %v177 = vld [vmem:[%s2 + $0x8] sm:$0xff]
    %v178 = vld [vmem:[%s2 + $0x10] sm:$0xff]
    %v179 = vld [vmem:[%s2 + $0x18] sm:$0xff]
    %v180 = vld [vmem:[%s2 + $0x20] sm:$0xff]
    %v181 = vld [vmem:[%s2 + $0x28] sm:$0xff]
    %v182 = vld [vmem:[%s2 + $0x30] sm:$0xff]
    %v183 = vld [vmem:[%s2 + $0x38] sm:$0xff]
    %v184 = vld [vmem:[%s2 + $0x40] sm:$0xff]
    %v185 = vld [vmem:[%s2 + $0x48] sm:$0xff]
    %v186 = vld [vmem:[%s2 + $0x50] sm:$0xff]
    %v187 = vld [vmem:[%s2 + $0x58] sm:$0xff]
    %v188 = vld [vmem:[%s2 + $0x60] sm:$0xff]
    %v189 = vld [vmem:[%s2 + $0x68] sm:$0xff]
    %v190 = vld [vmem:[%s2 + $0x70] sm:$0xff]
    %v191 = vld [vmem:[%s2 + $0x78] sm:$0xff]
    %v192 = vld [vmem:[%s2 + $0x80] sm:$0xff]
    %v193 = vld [vmem:[%s2 + $0x88] sm:$0xff]
    %v194 = vld [vmem:[%s2 + $0x90] sm:$0xff]
    %v195 = vld [vmem:[%s2 + $0x98] sm:$0xff]
    %v196 = vld [vmem:[%s2 + $0xa0] sm:$0xff]
    %v197 = vld [vmem:[%s2 + $0xa8] sm:$0xff]
    %v198 = vld [vmem:[%s2 + $0xb0] sm:$0xff]
    %v199 = vld [vmem:[%s2 + $0xb8] sm:$0xff]
    %v200 = vld [vmem:[%s2 + $0xc0] sm:$0xff]
    %v201 = vld [vmem:[%s2 + $0xc8] sm:$0xff]
    %v202 = vld [vmem:[%s2 + $0xd0] sm:$0xff]
    %v203 = vld [vmem:[%s2 + $0xd8] sm:$0xff]
    %v204 = vld [vmem:[%s2 + $0xe0] sm:$0xff]
    %v205 = vld [vmem:[%s2 + $0xe8] sm:$0xff]
    %v206 = vld [vmem:[%s2 + $0xf0] sm:$0xff]
    %v207 = vld [vmem:[%s2 + $0xf8] sm:$0xff]
    %v208 = vpack.c.bf16 %v174, %v172
    %v209 = vpack.c.bf16 %v175, %v173
    %v242 = vunpack.c.l.b16 %v176
    %v243 = vunpack.c.h.b16 %v176
    %v244 = vunpack.c.l.b16 %v177
    %v245 = vunpack.c.h.b16 %v177
    %v246 = vunpack.c.l.b16 %v178
    %v247 = vunpack.c.h.b16 %v178
    %v248 = vunpack.c.l.b16 %v179
    %v249 = vunpack.c.h.b16 %v179
    %v250 = vunpack.c.l.b16 %v180
    %v251 = vunpack.c.h.b16 %v180
    %v252 = vunpack.c.l.b16 %v181
    %v253 = vunpack.c.h.b16 %v181
    %v254 = vunpack.c.l.b16 %v182
    %v255 = vunpack.c.h.b16 %v182
    %v256 = vunpack.c.l.b16 %v183
    %v257 = vunpack.c.h.b16 %v183
    %v258 = vunpack.c.l.b16 %v184
    %v259 = vunpack.c.h.b16 %v184
    %v260 = vunpack.c.l.b16 %v185
    %v261 = vunpack.c.h.b16 %v185
    %v262 = vunpack.c.l.b16 %v186
    %v263 = vunpack.c.h.b16 %v186
    %v264 = vunpack.c.l.b16 %v187
    %v265 = vunpack.c.h.b16 %v187
    %v266 = vunpack.c.l.b16 %v188
    %v267 = vunpack.c.h.b16 %v188
    %v268 = vunpack.c.l.b16 %v189
    %v269 = vunpack.c.h.b16 %v189
    %v270 = vunpack.c.l.b16 %v190
    %v271 = vunpack.c.h.b16 %v190
    %v272 = vunpack.c.l.b16 %v191
    %v273 = vunpack.c.h.b16 %v191
    %v274 = vunpack.c.l.b16 %v192
    %v275 = vunpack.c.h.b16 %v192
    %v276 = vunpack.c.l.b16 %v193
    %v277 = vunpack.c.h.b16 %v193
    %v278 = vunpack.c.l.b16 %v194
    %v279 = vunpack.c.h.b16 %v194
    %v280 = vunpack.c.l.b16 %v195
    %v281 = vunpack.c.h.b16 %v195
    %v282 = vunpack.c.l.b16 %v196
    %v283 = vunpack.c.h.b16 %v196
    %v284 = vunpack.c.l.b16 %v197
    %v285 = vunpack.c.h.b16 %v197
    %v286 = vunpack.c.l.b16 %v198
    %v287 = vunpack.c.h.b16 %v198
    %v288 = vunpack.c.l.b16 %v199
    %v289 = vunpack.c.h.b16 %v199
    %v290 = vunpack.c.l.b16 %v200
    %v291 = vunpack.c.h.b16 %v200
    %v292 = vunpack.c.l.b16 %v201
    %v293 = vunpack.c.h.b16 %v201
    %v294 = vunpack.c.l.b16 %v202
    %v295 = vunpack.c.h.b16 %v202
    %v296 = vunpack.c.l.b16 %v203
    %v297 = vunpack.c.h.b16 %v203
    %v298 = vunpack.c.l.b16 %v204
    %v299 = vunpack.c.h.b16 %v204
    %v300 = vunpack.c.l.b16 %v205
    %v301 = vunpack.c.h.b16 %v205
    %v302 = vunpack.c.l.b16 %v206
    %v303 = vunpack.c.h.b16 %v206
    %v304 = vunpack.c.l.b16 %v207
    %v305 = vunpack.c.h.b16 %v207
    %v306 = vpack.c.b16 %v244, %v242
    %v307 = vpack.c.b16 %v245, %v243
    %v308 = vpack.c.b16 %v248, %v246
    %v309 = vpack.c.b16 %v249, %v247
    %v310 = vpack.c.b16 %v252, %v250
    %v311 = vpack.c.b16 %v253, %v251
    %v312 = vpack.c.b16 %v256, %v254
    %v313 = vpack.c.b16 %v257, %v255
    %v314 = vpack.c.b16 %v260, %v258
    %v315 = vpack.c.b16 %v261, %v259
    %v316 = vpack.c.b16 %v264, %v262
    %v317 = vpack.c.b16 %v265, %v263
    %v318 = vpack.c.b16 %v268, %v266
    %v319 = vpack.c.b16 %v269, %v267
    %v320 = vpack.c.b16 %v272, %v270
    %v321 = vpack.c.b16 %v273, %v271
    %v322 = vpack.c.b16 %v276, %v274
    %v323 = vpack.c.b16 %v277, %v275
    %v324 = vpack.c.b16 %v280, %v278
    %v325 = vpack.c.b16 %v281, %v279
    %v326 = vpack.c.b16 %v284, %v282
    %v327 = vpack.c.b16 %v285, %v283
    %v328 = vpack.c.b16 %v288, %v286
    %v329 = vpack.c.b16 %v289, %v287
    %v330 = vpack.c.b16 %v292, %v290
    %v331 = vpack.c.b16 %v293, %v291
    %v332 = vpack.c.b16 %v296, %v294
    %v333 = vpack.c.b16 %v297, %v295
    %v334 = vpack.c.b16 %v300, %v298
    %v335 = vpack.c.b16 %v301, %v299
    %v336 = vpack.c.b16 %v304, %v302
    %v337 = vpack.c.b16 %v305, %v303
    %370 = vmatprep.subr.bf16.mxu0 %v321
    %371 = vmatpush1.bf16.msra.mxu0 %v320
    %372 = vmatprep.subr.bf16.mxu0 %v319
    %373 = vmatpush1.bf16.msra.mxu0 %v318
    %374 = vmatprep.subr.bf16.mxu0 %v317
    %375 = vmatpush1.bf16.msra.mxu0 %v316
    %376 = vmatprep.subr.bf16.mxu0 %v315
    %377 = vmatpush1.bf16.msra.mxu0 %v314
    %378 = vmatprep.subr.bf16.mxu0 %v313
    %379 = vmatpush1.bf16.msra.mxu0 %v312
    %380 = vmatprep.subr.bf16.mxu0 %v311
    %381 = vmatpush1.bf16.msra.mxu0 %v310
    %382 = vmatprep.subr.bf16.mxu0 %v309
    %383 = vmatpush1.bf16.msra.mxu0 %v308
    %384 = vmatprep.subr.bf16.mxu0 %v307
    %385 = vmatpush1.bf16.msra.mxu0 %v306
    %386 = vmatprep.subr.bf16.mxu0 %v337
    %387 = vmatpush2.bf16.msra.mxu0 %v336
    %388 = vmatprep.subr.bf16.mxu0 %v335
    %389 = vmatpush2.bf16.msra.mxu0 %v334
    %390 = vmatprep.subr.bf16.mxu0 %v333
    %391 = vmatpush2.bf16.msra.mxu0 %v332
    %392 = vmatprep.subr.bf16.mxu0 %v331
    %393 = vmatpush2.bf16.msra.mxu0 %v330
    %394 = vmatprep.subr.bf16.mxu0 %v329
    %395 = vmatpush2.bf16.msra.mxu0 %v328
    %396 = vmatprep.subr.bf16.mxu0 %v327
    %397 = vmatpush2.bf16.msra.mxu0 %v326
    %398 = vmatprep.subr.bf16.mxu0 %v325
    %399 = vmatpush2.bf16.msra.mxu0 %v324
    %400 = vmatprep.subr.bf16.mxu0 %v323
    %401 = vmatpush2.bf16.msra.mxu0 %v322
    %402 = vmatprep.mubr.bf16.mxu0 %v209
    %403 = vmatmul.mubr.bf16.gmra.mxu0 %v208
    %v404 = vpop.f32.mrf.mxu0
    %v405 = vadd.f32 0.0, %v404
    %v406 = vpop.f32.mrf.mxu0
    %v407 = vadd.f32 0.0, %v406
    %v408 = vpop.f32.mrf.mxu0
    %v409 = vadd.f32 0.0, %v408
    %v410 = vpop.f32.mrf.mxu0
    %v411 = vadd.f32 0.0, %v410
    %412 = vdwg.mxu0
    %v413 = vmax.f32 %v405, 0.0
    %v414 = vmax.f32 %v407, 0.0
    %v415 = vmax.f32 %v409, 0.0
    %v416 = vmax.f32 %v411, 0.0
    %v417 = vld [vmem:[%s4] sm:$0xff]
    %v418 = vld [vmem:[%s4 + $0x8] sm:$0xff]
    %v419 = vld [vmem:[%s4 + $0x10] sm:$0xff]
    %v420 = vld [vmem:[%s4 + $0x18] sm:$0xff]
    %v421 = vmul.f32 %v413, %v417
    %v422 = vmul.f32 %v414, %v418
    %v423 = vmul.f32 %v415, %v419
    %v424 = vmul.f32 %v416, %v420
    %425 = vst [vmem:[#allocation2] sm:$0xff] %v421
    %426 = vst [vmem:[#allocation2 + $0x8] sm:$0xff] %v422
    %427 = vst [vmem:[#allocation2 + $0x10] sm:$0xff] %v423
    %428 = vst [vmem:[#allocation2 + $0x18] sm:$0xff] %v424
    // Predicated region
    $region22: #{prenet_forward.3} parent=1 // pred_check
      _
    $region23: #{prenet_forward.3} parent=1 // pred_check_branch
      %430 = sbr.rel (0) target = $region25
    $region24: #{prenet_forward.3} parent=1 // pred_region
      %s432 = ssub.s32 512, 512
      %433 = vsyncadd [#allocation3], %s432
      %s434 = sshll.u32 [#allocation2], 4
      %s435 = int_to_ptr.vmem [resolvable:$true] %s434
      %440 = dma.vmem_to_hbm [thread:$0]  %s435, 512, %s5, [#allocation3], 256, 256, 16
    $region25: #{prenet_forward.3} parent=1 // pred_fallthru
      _
    // Predicated region
    $region26: #{prenet_forward.3} parent=1 // pred_check
      _
    $region27: #{prenet_forward.3} parent=1 // pred_check_branch
      %442 = sbr.rel (0) target = $region29
    $region28: #{prenet_forward.3} parent=1 // pred_region
      %443 = dma.done [#allocation3], 512
    $region29: #{prenet_forward.3} parent=1 // pred_fallthru
      _
    %444 = vsyncpa [#allocation3], 1

</llo_original>
